<compile_context>
chip_gen: v7x
topology: tpu7x:2x2x1
jax: 0.10.0
libtpu: 0.0.40
codegen_flags: <defaults>
</compile_context>

<pallas_src>
import jax
import jax.numpy as jnp
from jax.experimental import pallas as pl
from jax.experimental.pallas import tpu as pltpu


def affine_kernel(kb_ref, x_ref, o_ref):
    # kb_ref: (2,) f32 in SMEM -> [k, b].  Scalar SMEM reads are free compared
    # to the HBM-bound DMA loop and avoid a recompile per (k, b) pair.
    k = kb_ref[0]
    b = kb_ref[1]
    x = x_ref[...]
    # Compute in f32 (exact for the f32 spec input; keeps k/b precise for
    # narrower input dtypes), cast back to the output dtype on store.
    y = x.astype(jnp.float32) * k + b
    o_ref[...] = y.astype(o_ref.dtype)


def _pick_tile_rows(rows: int, row_bytes: int, budget_bytes: int = 4 << 20) -> int:
    """Pick a row-tile: whole slab for small inputs, else a multiple-of-8 tile
    within the per-block VMEM budget, with >= 2 grid steps for megacore."""
    total = rows * row_bytes
    # Small slabs: one grid step -> no per-step pipeline overhead at all.
    if total <= (2 << 20) or rows < 16:
        return rows
    # Per-block budget (2 arrays x 2 pipeline buffers x block stays <= ~16 MiB,
    # safe under v7x's 32 MiB scoped-VMEM default).  Multiple of 8 sublanes.
    cap = max(8, (budget_bytes // row_bytes) // 8 * 8)
    # Keep at least 2 grid steps so the "parallel" axis can shard across
    # v7x's two TensorCores.
    half = max(8, (rows // 2) // 8 * 8)
    return min(cap, half)


def _flatten_lane_dense(x: jax.Array) -> jax.Array:
    """Reshape to a 2-D slab (rows, L) with L a multiple of 128 when possible,
    padding the flat view as a last resort (pad sliced off by the caller)."""
    size = x.size
    W = x.shape[-1]
    if W % 128 == 0:
        return x.reshape(size // W, W)
    for L in (2048, 1024, 512, 256, 128):
        if size % L == 0:
            return x.reshape(size // L, L)
    L = 128
    pad = (-size) % L
    xf = jnp.pad(x.reshape(-1), (0, pad))
    return xf.reshape((size + pad) // L, L)


def affine(x: jax.Array, k: float, b: float) -> jax.Array:
    orig_shape = x.shape
    orig_size = x.size

    x2 = _flatten_lane_dense(x)          # free HBM reshape (pads only if ragged)
    rows, W = x2.shape

    itemsize = jnp.dtype(x.dtype).itemsize
    row_bytes = W * itemsize
    tile_rows = _pick_tile_rows(rows, row_bytes)
    grid = (pl.cdiv(rows, tile_rows),)   # ragged last block is masked by Pallas

    kb = jnp.asarray([k, b], dtype=jnp.float32)

    cost = pl.CostEstimate(
        flops=2 * orig_size,
        bytes_accessed=2 * orig_size * itemsize,
        transcendentals=0,
    )

    out2 = pl.pallas_call(
        affine_kernel,
        out_shape=jax.ShapeDtypeStruct((rows, W), x.dtype),
        grid_spec=pl.GridSpec(
            grid=grid,
            in_specs=[
                pl.BlockSpec(memory_space=pltpu.MemorySpace.SMEM),  # (2,) k, b
                pl.BlockSpec((tile_rows, W), lambda i: (i, 0)),     # x tile
            ],
            out_specs=pl.BlockSpec((tile_rows, W), lambda i: (i, 0)),
        ),
        compiler_params=pltpu.CompilerParams(
            dimension_semantics=("parallel",),
        ),
        cost_estimate=cost,
    )(kb, x2)

    if out2.size != orig_size:           # only when the flat view was padded
        out2 = out2.reshape(-1)[:orig_size]
    return out2.reshape(orig_shape)


if __name__ == "__main__":
    # Deterministic parameters (module __init__ takes scalars k, b).
    k = 2.5
    b = -0.75

    key = jax.random.PRNGKey(0)
    x = jax.random.normal(key, (1, 256, 256), dtype=jnp.float32)

    y = affine(x, k, b)
    y = jax.block_until_ready(y)

    # Reference check (plain JAX, mirrors torch semantics exactly).
    ref = k * x + b
    assert y.shape == ref.shape and y.dtype == ref.dtype
    assert jnp.allclose(y, ref, atol=1e-6, rtol=1e-6)

    print("KERNEL_OK")
</pallas_src>

<mosaic_0001>
module attributes {stable_mosaic.version = 11 : i64} {
  func.func @affine_kernel(%arg0: i32, %arg1: memref<2xf32, #tpu.memory_space<smem>>, %arg2: memref<256x256xf32, #tpu.memory_space<vmem>>, %arg3: memref<256x256xf32, #tpu.memory_space<vmem>>) attributes {dimension_semantics = [#tpu.dimension_semantics<parallel>], iteration_bounds = array<i64: 1>, scalar_prefetch = 0 : i64, scratch_operands = 0 : i64, tpu.core_type = #tpu.core_type<tc>, window_params = [{transform_indices = @transform_0, window_bounds = array<i64: 2>}, {transform_indices = @transform_1, window_bounds = array<i64: 256, 256>}, {transform_indices = @transform_2, window_bounds = array<i64: 256, 256>}]} {
    %c0 = arith.constant 0 : index
    %0 = memref.load %arg1[%c0] : memref<2xf32, #tpu.memory_space<smem>>
    %c1 = arith.constant 1 : index
    %1 = memref.load %arg1[%c1] : memref<2xf32, #tpu.memory_space<smem>>
    %c0_0 = arith.constant 0 : index
    %c0_1 = arith.constant 0 : index
    %2 = vector.load %arg2[%c0_0, %c0_1] : memref<256x256xf32, #tpu.memory_space<vmem>>, vector<256x256xf32>
    %3 = vector.broadcast %0 : f32 to vector<256x256xf32>
    %4 = arith.mulf %2, %3 : vector<256x256xf32>
    %5 = vector.broadcast %1 : f32 to vector<256x256xf32>
    %6 = arith.addf %4, %5 : vector<256x256xf32>
    %c0_2 = arith.constant 0 : index
    %c0_3 = arith.constant 0 : index
    %7 = vector.load %arg3[%c0_2, %c0_3] : memref<256x256xf32, #tpu.memory_space<vmem>>, vector<256x256xf32>
    tpu.vector_store %arg3[%c0_2, %c0_3], %6 {strides = array<i32>} : memref<256x256xf32, #tpu.memory_space<vmem>>, vector<256x256xf32>,
    return
  }
  func.func @transform_0(%arg0: i32) -> i32 {
    %c0_i32 = arith.constant 0 : i32
    %c0_i32_0 = arith.constant 0 : i32
    return %c0_i32 : i32
  }
  func.func @transform_1(%arg0: i32) -> (i32, i32) {
    %c0_i32 = arith.constant 0 : i32
    %c0_i32_0 = arith.constant 0 : i32
    return %arg0, %c0_i32 : i32, i32
  }
  func.func @transform_2(%arg0: i32) -> (i32, i32) {
    %c0_i32 = arith.constant 0 : i32
    %c0_i32_0 = arith.constant 0 : i32
    return %arg0, %c0_i32 : i32, i32
  }
}

</mosaic_0001>

<llo_original>
// kernel: tpu_custom_call.1
$region0: #{tpu_custom_call.1}
  #allocation0 [shape = 'u32[]', space=smem, size = 0x4, offset = 0x4, fixed_abs, tag = 'smem constant byte address 0x4 - core index']
  #allocation1 [shape = 'u32[144,128]{1,0:T(1,128)}', space=vmem, size = 0x12000, scoped, tag = 'internal scratch']
  %s0 = inlined_call_operand.hbm [shape: f32[2], index: 0, kind: input, shape index: {}]
  %s1 = inlined_call_operand.hbm [shape: f32[256,256], index: 1, kind: input, shape index: {}]
  %s2 = inlined_call_operand.hbm [shape: f32[256,256], index: 2, kind: output, shape index: {}]
  %s3 = sld [smem:[#allocation0]]
  $region26: #{tpu_custom_call.1} parent=0
    _
  %s5 = ssub.s32 1, %s3
  %s6 = scalar_select 0, %s5, %s3
  $region1: #{tpu_custom_call.1} parent=0
    #allocation2 [shape = 'u8[512]{0}', space=smem, size = 0x200, scoped, tag = 'input window, operand 0, single buffered']
    #allocation3 [shape = 's32[1]{0}', space=sflag, size = 0x4, scoped, tag = 'scoped memory for tpu_custom_call.1']
    #allocation4 [shape = 's32[1]{0}', space=sflag, size = 0x4, scoped, tag = 'scoped memory for tpu_custom_call.1']
    #allocation5 [shape = 's32[1]{0}', space=sflag, size = 0x4, scoped, tag = 'scoped memory for tpu_custom_call.1']
    #allocation6 [shape = 'u8[262144]{0}', space=vmem, size = 0x40000, scoped, tag = 'input window, operand 1, single buffered']
    #allocation7 [shape = 'u8[262144]{0}', space=vmem, size = 0x40000, scoped, tag = 'output window, operand 0, single buffered']
    %7 = vsyncpa [#allocation5], 0
    %8 = vsyncpa [#allocation3], 0
    %9 = vsyncpa [#allocation4], 0
    // Predicated region
    $region2: #{tpu_custom_call.1} parent=1 // pred_check
      _
    $region3: #{tpu_custom_call.1} parent=1 // pred_check_branch
      %11 = sbr.rel (0) target = $region5
    $region4: #{tpu_custom_call.1} parent=1 // pred_region
      %s13 = ssub.s32 16, 16
      %14 = vsyncadd [#allocation5], %s13
      %17 = dma.hbm_to_smem %s0, 16, [#allocation2], [#allocation5]
    $region5: #{tpu_custom_call.1} parent=1 // pred_fallthru
      _
    // Predicated region
    $region6: #{tpu_custom_call.1} parent=1 // pred_check
      _
    $region7: #{tpu_custom_call.1} parent=1 // pred_check_branch
      %19 = sbr.rel (0) target = $region9
    $region8: #{tpu_custom_call.1} parent=1 // pred_region
      %s21 = ssub.s32 8192, 8192
      %22 = vsyncadd [#allocation3], %s21
      %s23 = sshll.u32 [#allocation6], 4
      %s24 = int_to_ptr.vmem [resolvable:$true] %s23
      %29 = dma.hbm_to_vmem [thread:$0]  %s1, 8192, %s24, [#allocation3], 256, 256, 16
    $region9: #{tpu_custom_call.1} parent=1 // pred_fallthru
      _
    // Predicated region
    $region10: #{tpu_custom_call.1} parent=1 // pred_check
      _
    $region11: #{tpu_custom_call.1} parent=1 // pred_check_branch
      %31 = sbr.rel (0) target = $region13
    $region12: #{tpu_custom_call.1} parent=1 // pred_region
      %32 = dma.done [#allocation5], 16
    $region13: #{tpu_custom_call.1} parent=1 // pred_fallthru
      _
    // Predicated region
    $region14: #{tpu_custom_call.1} parent=1 // pred_check
      _
    $region15: #{tpu_custom_call.1} parent=1 // pred_check_branch
      %34 = sbr.rel (0) target = $region17
    $region16: #{tpu_custom_call.1} parent=1 // pred_region
      %35 = dma.done [#allocation3], 8192
    $region17: #{tpu_custom_call.1} parent=1 // pred_fallthru
      _
    %36 = sfence
    %s37 = sld [smem:[#allocation2]]
    %s38 = sld [smem:[#allocation2 + $0x1]]
    %v39 = vld [vmem:[#allocation6] sm:$0xff]
    %v40 = vld [vmem:[#allocation6 + $0x8] sm:$0xff]
    %v41 = vld [vmem:[#allocation6 + $0x10] sm:$0xff]
    %v42 = vld [vmem:[#allocation6 + $0x18] sm:$0xff]
    %v43 = vld [vmem:[#allocation6 + $0x20] sm:$0xff]
    %v44 = vld [vmem:[#allocation6 + $0x28] sm:$0xff]
    %v45 = vld [vmem:[#allocation6 + $0x30] sm:$0xff]
    %v46 = vld [vmem:[#allocation6 + $0x38] sm:$0xff]
    %v47 = vld [vmem:[#allocation6 + $0x40] sm:$0xff]
    %v48 = vld [vmem:[#allocation6 + $0x48] sm:$0xff]
    %v49 = vld [vmem:[#allocation6 + $0x50] sm:$0xff]
    %v50 = vld [vmem:[#allocation6 + $0x58] sm:$0xff]
    %v51 = vld [vmem:[#allocation6 + $0x60] sm:$0xff]
    %v52 = vld [vmem:[#allocation6 + $0x68] sm:$0xff]
    %v53 = vld [vmem:[#allocation6 + $0x70] sm:$0xff]
    %v54 = vld [vmem:[#allocation6 + $0x78] sm:$0xff]
    %v55 = vld [vmem:[#allocation6 + $0x80] sm:$0xff]
    %v56 = vld [vmem:[#allocation6 + $0x88] sm:$0xff]
    %v57 = vld [vmem:[#allocation6 + $0x90] sm:$0xff]
    %v58 = vld [vmem:[#allocation6 + $0x98] sm:$0xff]
    %v59 = vld [vmem:[#allocation6 + $0xa0] sm:$0xff]
    %v60 = vld [vmem:[#allocation6 + $0xa8] sm:$0xff]
    %v61 = vld [vmem:[#allocation6 + $0xb0] sm:$0xff]
    %v62 = vld [vmem:[#allocation6 + $0xb8] sm:$0xff]
    %v63 = vld [vmem:[#allocation6 + $0xc0] sm:$0xff]
    %v64 = vld [vmem:[#allocation6 + $0xc8] sm:$0xff]
    %v65 = vld [vmem:[#allocation6 + $0xd0] sm:$0xff]
    %v66 = vld [vmem:[#allocation6 + $0xd8] sm:$0xff]
    %v67 = vld [vmem:[#allocation6 + $0xe0] sm:$0xff]
    %v68 = vld [vmem:[#allocation6 + $0xe8] sm:$0xff]
    %v69 = vld [vmem:[#allocation6 + $0xf0] sm:$0xff]
    %v70 = vld [vmem:[#allocation6 + $0xf8] sm:$0xff]
    %v71 = vld [vmem:[#allocation6 + $0x100] sm:$0xff]
    %v72 = vld [vmem:[#allocation6 + $0x108] sm:$0xff]
    %v73 = vld [vmem:[#allocation6 + $0x110] sm:$0xff]
    %v74 = vld [vmem:[#allocation6 + $0x118] sm:$0xff]
    %v75 = vld [vmem:[#allocation6 + $0x120] sm:$0xff]
    %v76 = vld [vmem:[#allocation6 + $0x128] sm:$0xff]
    %v77 = vld [vmem:[#allocation6 + $0x130] sm:$0xff]
    %v78 = vld [vmem:[#allocation6 + $0x138] sm:$0xff]
    %v79 = vld [vmem:[#allocation6 + $0x140] sm:$0xff]
    %v80 = vld [vmem:[#allocation6 + $0x148] sm:$0xff]
    %v81 = vld [vmem:[#allocation6 + $0x150] sm:$0xff]
    %v82 = vld [vmem:[#allocation6 + $0x158] sm:$0xff]
    %v83 = vld [vmem:[#allocation6 + $0x160] sm:$0xff]
    %v84 = vld [vmem:[#allocation6 + $0x168] sm:$0xff]
    %v85 = vld [vmem:[#allocation6 + $0x170] sm:$0xff]
    %v86 = vld [vmem:[#allocation6 + $0x178] sm:$0xff]
    %v87 = vld [vmem:[#allocation6 + $0x180] sm:$0xff]
    %v88 = vld [vmem:[#allocation6 + $0x188] sm:$0xff]
    %v89 = vld [vmem:[#allocation6 + $0x190] sm:$0xff]
    %v90 = vld [vmem:[#allocation6 + $0x198] sm:$0xff]
    %v91 = vld [vmem:[#allocation6 + $0x1a0] sm:$0xff]
    %v92 = vld [vmem:[#allocation6 + $0x1a8] sm:$0xff]
    %v93 = vld [vmem:[#allocation6 + $0x1b0] sm:$0xff]
    %v94 = vld [vmem:[#allocation6 + $0x1b8] sm:$0xff]
    %v95 = vld [vmem:[#allocation6 + $0x1c0] sm:$0xff]
    %v96 = vld [vmem:[#allocation6 + $0x1c8] sm:$0xff]
    %v97 = vld [vmem:[#allocation6 + $0x1d0] sm:$0xff]
    %v98 = vld [vmem:[#allocation6 + $0x1d8] sm:$0xff]
    %v99 = vld [vmem:[#allocation6 + $0x1e0] sm:$0xff]
    %v100 = vld [vmem:[#allocation6 + $0x1e8] sm:$0xff]
    %v101 = vld [vmem:[#allocation6 + $0x1f0] sm:$0xff]
    %v102 = vld [vmem:[#allocation6 + $0x1f8] sm:$0xff]
    %v103 = vstv %s37
    %v104 = vmul.f32 %v39, %v103
    %v105 = vmul.f32 %v40, %v103
    %v106 = vmul.f32 %v41, %v103
    %v107 = vmul.f32 %v42, %v103
    %v108 = vmul.f32 %v43, %v103
    %v109 = vmul.f32 %v44, %v103
    %v110 = vmul.f32 %v45, %v103
    %v111 = vmul.f32 %v46, %v103
    %v112 = vmul.f32 %v47, %v103
    %v113 = vmul.f32 %v48, %v103
    %v114 = vmul.f32 %v49, %v103
    %v115 = vmul.f32 %v50, %v103
    %v116 = vmul.f32 %v51, %v103
    %v117 = vmul.f32 %v52, %v103
    %v118 = vmul.f32 %v53, %v103
    %v119 = vmul.f32 %v54, %v103
    %v120 = vmul.f32 %v55, %v103
    %v121 = vmul.f32 %v56, %v103
    %v122 = vmul.f32 %v57, %v103
    %v123 = vmul.f32 %v58, %v103
    %v124 = vmul.f32 %v59, %v103
    %v125 = vmul.f32 %v60, %v103
    %v126 = vmul.f32 %v61, %v103
    %v127 = vmul.f32 %v62, %v103
    %v128 = vmul.f32 %v63, %v103
    %v129 = vmul.f32 %v64, %v103
    %v130 = vmul.f32 %v65, %v103
    %v131 = vmul.f32 %v66, %v103
    %v132 = vmul.f32 %v67, %v103
    %v133 = vmul.f32 %v68, %v103
    %v134 = vmul.f32 %v69, %v103
    %v135 = vmul.f32 %v70, %v103
    %v136 = vmul.f32 %v71, %v103
    %v137 = vmul.f32 %v72, %v103
    %v138 = vmul.f32 %v73, %v103
    %v139 = vmul.f32 %v74, %v103
    %v140 = vmul.f32 %v75, %v103
    %v141 = vmul.f32 %v76, %v103
    %v142 = vmul.f32 %v77, %v103
    %v143 = vmul.f32 %v78, %v103
    %v144 = vmul.f32 %v79, %v103
    %v145 = vmul.f32 %v80, %v103
    %v146 = vmul.f32 %v81, %v103
    %v147 = vmul.f32 %v82, %v103
    %v148 = vmul.f32 %v83, %v103
    %v149 = vmul.f32 %v84, %v103
    %v150 = vmul.f32 %v85, %v103
    %v151 = vmul.f32 %v86, %v103
    %v152 = vmul.f32 %v87, %v103
    %v153 = vmul.f32 %v88, %v103
    %v154 = vmul.f32 %v89, %v103
    %v155 = vmul.f32 %v90, %v103
    %v156 = vmul.f32 %v91, %v103
    %v157 = vmul.f32 %v92, %v103
    %v158 = vmul.f32 %v93, %v103
    %v159 = vmul.f32 %v94, %v103
    %v160 = vmul.f32 %v95, %v103
    %v161 = vmul.f32 %v96, %v103
    %v162 = vmul.f32 %v97, %v103
    %v163 = vmul.f32 %v98, %v103
    %v164 = vmul.f32 %v99, %v103
    %v165 = vmul.f32 %v100, %v103
    %v166 = vmul.f32 %v101, %v103
    %v167 = vmul.f32 %v102, %v103
    %v168 = vstv %s38
    %v169 = vadd.f32 %v104, %v168
    %v170 = vadd.f32 %v105, %v168
    %v171 = vadd.f32 %v106, %v168
    %v172 = vadd.f32 %v107, %v168
    %v173 = vadd.f32 %v108, %v168
    %v174 = vadd.f32 %v109, %v168
    %v175 = vadd.f32 %v110, %v168
    %v176 = vadd.f32 %v111, %v168
    %v177 = vadd.f32 %v112, %v168
    %v178 = vadd.f32 %v113, %v168
    %v179 = vadd.f32 %v114, %v168
    %v180 = vadd.f32 %v115, %v168
    %v181 = vadd.f32 %v116, %v168
    %v182 = vadd.f32 %v117, %v168
    %v183 = vadd.f32 %v118, %v168
    %v184 = vadd.f32 %v119, %v168
    %v185 = vadd.f32 %v120, %v168
    %v186 = vadd.f32 %v121, %v168
    %v187 = vadd.f32 %v122, %v168
    %v188 = vadd.f32 %v123, %v168
    %v189 = vadd.f32 %v124, %v168
    %v190 = vadd.f32 %v125, %v168
    %v191 = vadd.f32 %v126, %v168
    %v192 = vadd.f32 %v127, %v168
    %v193 = vadd.f32 %v128, %v168
    %v194 = vadd.f32 %v129, %v168
    %v195 = vadd.f32 %v130, %v168
    %v196 = vadd.f32 %v131, %v168
    %v197 = vadd.f32 %v132, %v168
    %v198 = vadd.f32 %v133, %v168
    %v199 = vadd.f32 %v134, %v168
    %v200 = vadd.f32 %v135, %v168
    %v201 = vadd.f32 %v136, %v168
    %v202 = vadd.f32 %v137, %v168
    %v203 = vadd.f32 %v138, %v168
    %v204 = vadd.f32 %v139, %v168
    %v205 = vadd.f32 %v140, %v168
    %v206 = vadd.f32 %v141, %v168
    %v207 = vadd.f32 %v142, %v168
    %v208 = vadd.f32 %v143, %v168
    %v209 = vadd.f32 %v144, %v168
    %v210 = vadd.f32 %v145, %v168
    %v211 = vadd.f32 %v146, %v168
    %v212 = vadd.f32 %v147, %v168
    %v213 = vadd.f32 %v148, %v168
    %v214 = vadd.f32 %v149, %v168
    %v215 = vadd.f32 %v150, %v168
    %v216 = vadd.f32 %v151, %v168
    %v217 = vadd.f32 %v152, %v168
    %v218 = vadd.f32 %v153, %v168
    %v219 = vadd.f32 %v154, %v168
    %v220 = vadd.f32 %v155, %v168
    %v221 = vadd.f32 %v156, %v168
    %v222 = vadd.f32 %v157, %v168
    %v223 = vadd.f32 %v158, %v168
    %v224 = vadd.f32 %v159, %v168
    %v225 = vadd.f32 %v160, %v168
    %v226 = vadd.f32 %v161, %v168
    %v227 = vadd.f32 %v162, %v168
    %v228 = vadd.f32 %v163, %v168
    %v229 = vadd.f32 %v164, %v168
    %v230 = vadd.f32 %v165, %v168
    %v231 = vadd.f32 %v166, %v168
    %v232 = vadd.f32 %v167, %v168
    %233 = vst [vmem:[#allocation7] sm:$0xff] %v169
    %234 = vst [vmem:[#allocation7 + $0x8] sm:$0xff] %v170
    %235 = vst [vmem:[#allocation7 + $0x10] sm:$0xff] %v171
    %236 = vst [vmem:[#allocation7 + $0x18] sm:$0xff] %v172
    %237 = vst [vmem:[#allocation7 + $0x20] sm:$0xff] %v173
    %238 = vst [vmem:[#allocation7 + $0x28] sm:$0xff] %v174
    %239 = vst [vmem:[#allocation7 + $0x30] sm:$0xff] %v175
    %240 = vst [vmem:[#allocation7 + $0x38] sm:$0xff] %v176
    %241 = vst [vmem:[#allocation7 + $0x40] sm:$0xff] %v177
    %242 = vst [vmem:[#allocation7 + $0x48] sm:$0xff] %v178
    %243 = vst [vmem:[#allocation7 + $0x50] sm:$0xff] %v179
    %244 = vst [vmem:[#allocation7 + $0x58] sm:$0xff] %v180
    %245 = vst [vmem:[#allocation7 + $0x60] sm:$0xff] %v181
    %246 = vst [vmem:[#allocation7 + $0x68] sm:$0xff] %v182
    %247 = vst [vmem:[#allocation7 + $0x70] sm:$0xff] %v183
    %248 = vst [vmem:[#allocation7 + $0x78] sm:$0xff] %v184
    %249 = vst [vmem:[#allocation7 + $0x80] sm:$0xff] %v185
    %250 = vst [vmem:[#allocation7 + $0x88] sm:$0xff] %v186
    %251 = vst [vmem:[#allocation7 + $0x90] sm:$0xff] %v187
    %252 = vst [vmem:[#allocation7 + $0x98] sm:$0xff] %v188
    %253 = vst [vmem:[#allocation7 + $0xa0] sm:$0xff] %v189
    %254 = vst [vmem:[#allocation7 + $0xa8] sm:$0xff] %v190
    %255 = vst [vmem:[#allocation7 + $0xb0] sm:$0xff] %v191
    %256 = vst [vmem:[#allocation7 + $0xb8] sm:$0xff] %v192
    %257 = vst [vmem:[#allocation7 + $0xc0] sm:$0xff] %v193
    %258 = vst [vmem:[#allocation7 + $0xc8] sm:$0xff] %v194
    %259 = vst [vmem:[#allocation7 + $0xd0] sm:$0xff] %v195
    %260 = vst [vmem:[#allocation7 + $0xd8] sm:$0xff] %v196
    %261 = vst [vmem:[#allocation7 + $0xe0] sm:$0xff] %v197
    %262 = vst [vmem:[#allocation7 + $0xe8] sm:$0xff] %v198
    %263 = vst [vmem:[#allocation7 + $0xf0] sm:$0xff] %v199
    %264 = vst [vmem:[#allocation7 + $0xf8] sm:$0xff] %v200
    %265 = vst [vmem:[#allocation7 + $0x100] sm:$0xff] %v201
    %266 = vst [vmem:[#allocation7 + $0x108] sm:$0xff] %v202
    %267 = vst [vmem:[#allocation7 + $0x110] sm:$0xff] %v203
    %268 = vst [vmem:[#allocation7 + $0x118] sm:$0xff] %v204
    %269 = vst [vmem:[#allocation7 + $0x120] sm:$0xff] %v205
    %270 = vst [vmem:[#allocation7 + $0x128] sm:$0xff] %v206
    %271 = vst [vmem:[#allocation7 + $0x130] sm:$0xff] %v207
    %272 = vst [vmem:[#allocation7 + $0x138] sm:$0xff] %v208
    %273 = vst [vmem:[#allocation7 + $0x140] sm:$0xff] %v209
    %274 = vst [vmem:[#allocation7 + $0x148] sm:$0xff] %v210
    %275 = vst [vmem:[#allocation7 + $0x150] sm:$0xff] %v211
    %276 = vst [vmem:[#allocation7 + $0x158] sm:$0xff] %v212
    %277 = vst [vmem:[#allocation7 + $0x160] sm:$0xff] %v213
    %278 = vst [vmem:[#allocation7 + $0x168] sm:$0xff] %v214
    %279 = vst [vmem:[#allocation7 + $0x170] sm:$0xff] %v215
    %280 = vst [vmem:[#allocation7 + $0x178] sm:$0xff] %v216
    %281 = vst [vmem:[#allocation7 + $0x180] sm:$0xff] %v217
    %282 = vst [vmem:[#allocation7 + $0x188] sm:$0xff] %v218
    %283 = vst [vmem:[#allocation7 + $0x190] sm:$0xff] %v219
    %284 = vst [vmem:[#allocation7 + $0x198] sm:$0xff] %v220
    %285 = vst [vmem:[#allocation7 + $0x1a0] sm:$0xff] %v221
    %286 = vst [vmem:[#allocation7 + $0x1a8] sm:$0xff] %v222
    %287 = vst [vmem:[#allocation7 + $0x1b0] sm:$0xff] %v223
    %288 = vst [vmem:[#allocation7 + $0x1b8] sm:$0xff] %v224
    %289 = vst [vmem:[#allocation7 + $0x1c0] sm:$0xff] %v225
    %290 = vst [vmem:[#allocation7 + $0x1c8] sm:$0xff] %v226
    %291 = vst [vmem:[#allocation7 + $0x1d0] sm:$0xff] %v227
    %292 = vst [vmem:[#allocation7 + $0x1d8] sm:$0xff] %v228
    %293 = vst [vmem:[#allocation7 + $0x1e0] sm:$0xff] %v229
    %294 = vst [vmem:[#allocation7 + $0x1e8] sm:$0xff] %v230
    %295 = vst [vmem:[#allocation7 + $0x1f0] sm:$0xff] %v231
    %296 = vst [vmem:[#allocation7 + $0x1f8] sm:$0xff] %v232
    // Predicated region
    $region18: #{tpu_custom_call.1} parent=1 // pred_check
      _
    $region19: #{tpu_custom_call.1} parent=1 // pred_check_branch
      %298 = sbr.rel (0) target = $region21
    $region20: #{tpu_custom_call.1} parent=1 // pred_region
      %s300 = ssub.s32 8192, 8192
      %301 = vsyncadd [#allocation4], %s300
      %s302 = sshll.u32 [#allocation7], 4
      %s303 = int_to_ptr.vmem [resolvable:$true] %s302
      %308 = dma.vmem_to_hbm [thread:$0]  %s303, 8192, %s2, [#allocation4], 256, 256, 16
    $region21: #{tpu_custom_call.1} parent=1 // pred_fallthru
      _
    // Predicated region
    $region22: #{tpu_custom_call.1} parent=1 // pred_check
      _
    $region23: #{tpu_custom_call.1} parent=1 // pred_check_branch
      %310 = sbr.rel (0) target = $region25
    $region24: #{tpu_custom_call.1} parent=1 // pred_region
      %311 = dma.done [#allocation4], 8192
    $region25: #{tpu_custom_call.1} parent=1 // pred_fallthru
      _
    %312 = vsyncpa [#allocation3], 1
    %313 = vsyncpa [#allocation4], 1
    %314 = vsyncpa [#allocation5], 1

</llo_original>
